<compile_context>
chip_gen: v7x
topology: tpu7x:2x2x1
jax: 0.10.0
libtpu: 0.0.40
codegen_flags: <defaults>
</compile_context>

<pallas_src>
import jax
import jax.numpy as jnp
from jax.experimental import pallas as pl
from jax.experimental.pallas import tpu as pltpu


def _round_up(x, m):
    return (x + m - 1) // m * m


# ----------------------------------------------------------------------------
# Fused MSCA Pallas kernel (local branch + folded global bias + sigmoid)
# ----------------------------------------------------------------------------
def _msca_local_kernel(x_ref, w1_ref, b1_ref, w2_ref, b2xg_ref, o_ref):
    """NCHW layout, channels on sublanes, pixels on lanes.

    Shapes seen by the kernel (batch dim squeezed away by the BlockSpec):
      x_ref:    (C, TILE_HW)  f32   pixel tile
      w1_ref:   (CMID, C)     bf16  conv1 weight (BN1 folded)
      b1_ref:   (CMID, 1)     f32   conv1 bias   (BN1 folded)
      w2_ref:   (C, CMID)     bf16  conv2 weight (BN2 folded)
      b2xg_ref: (C, 1)        f32   conv2 bias (BN2 folded) + per-image global xg
      o_ref:    (C, TILE_HW)  bf16/f32 sigmoid attention weights
    """
    f32 = jnp.float32
    bf16 = jnp.bfloat16

    xb = x_ref[...].astype(bf16)                                   # cast in-kernel
    h = jnp.dot(w1_ref[...], xb, preferred_element_type=f32)       # (CMID, TILE_HW)
    h = jnp.maximum(h + b1_ref[...], 0.0)
    xl = jnp.dot(w2_ref[...], h.astype(bf16),
                 preferred_element_type=f32)                       # (C, TILE_HW)
    z = xl + b2xg_ref[...]                                         # + b2 + xg (per image)
    wei = 0.5 * jnp.tanh(0.5 * z) + 0.5                            # exact sigmoid, 1 EUP op
    o_ref[...] = wei.astype(o_ref.dtype)


# ----------------------------------------------------------------------------
# Wrapper
# ----------------------------------------------------------------------------
def _vmem_footprint_bytes(C, Cmid, tile_hw, out_itemsize):
    stream = 2 * C * tile_hw * (4 + out_itemsize)   # double-buffered x + out tiles
    interm = 4 * C * tile_hw * 4                    # f32 temporaries (h, xl, z, wei)
    weights = 2 * (2 * Cmid * C * 2 + (Cmid + C) * 4)
    return stream + interm + weights


def msca_forward(x_nchw, params, *, out_dtype=jnp.bfloat16, tile_hw_cap=8192,
                 vmem_budget_bytes=24 * 1024 * 1024):
    """x_nchw: (B, C, H, W) float32.  params: folded matmul-form weights/biases."""
    B, C, H, W = x_nchw.shape
    Cmid = params["w1"].shape[1]
    HW = H * W
    x_flat = x_nchw.reshape(B, C, HW)                       # free reshape, no transpose

    # ---- global branch: tiny per-image MLP, plain-JAX f32 prologue ----------------
    pooled = jnp.mean(x_flat.astype(jnp.float32), axis=2)                   # (B, C)
    g = jnp.maximum(pooled @ params["wg1"] + params["bg1"], 0.0)
    xg = g @ params["wg2"] + params["bg2"]                                  # (B, C)
    # Fold xg and the BN-folded conv2 bias into one per-image bias operand.
    b2xg = (xg + params["b2"][None, :])[:, :, None].astype(jnp.float32)     # (B, C, 1)

    # ---- kernel-side weights: (Cout, Cin) orientation, bf16 for the MXU -----------
    w1_k = jnp.transpose(params["w1"]).astype(jnp.bfloat16)                 # (Cmid, C)
    w2_k = jnp.transpose(params["w2"]).astype(jnp.bfloat16)                 # (C, Cmid)
    b1_k = params["b1"][:, None].astype(jnp.float32)                        # (Cmid, 1)

    # ---- spatial tiling on the lane axis (multiples of 128) -----------------------
    out_isz = jnp.dtype(out_dtype).itemsize
    tile_hw = min(_round_up(HW, 128), _round_up(tile_hw_cap, 128))
    # v7x has 2 TensorCores: make sure single-image calls still get >= 2 grid steps.
    if B < 2 and tile_hw > 128 and _round_up(HW, tile_hw) // tile_hw < 2:
        tile_hw = _round_up(tile_hw // 2, 128)
    # Generation-aware VMEM budget (v7x scoped default is 32 MiB): shrink tile to fit.
    while tile_hw > 128 and _vmem_footprint_bytes(C, Cmid, tile_hw, out_isz) > vmem_budget_bytes:
        tile_hw = _round_up(tile_hw // 2, 128)
    HWp = _round_up(HW, tile_hw)
    num_tiles = HWp // tile_hw
    if HWp != HW:
        x_flat = jnp.pad(x_flat, ((0, 0), (0, 0), (0, HWp - HW)))

    vmem_limit = int(min(max(2 * _vmem_footprint_bytes(C, Cmid, tile_hw, out_isz),
                             8 * 1024 * 1024), 32 * 1024 * 1024))

    # Advisory cost estimate so XLA schedules the custom call sensibly.
    flops = 4 * B * HWp * C * Cmid
    bytes_accessed = (B * HWp * C * (x_flat.dtype.itemsize + out_isz)
                      + B * C * 4 + 2 * Cmid * C * 2 + (Cmid + C) * 4)
    cost = pl.CostEstimate(flops=int(flops), transcendentals=int(B * HWp * C),
                           bytes_accessed=int(bytes_accessed))

    out = pl.pallas_call(
        _msca_local_kernel,
        out_shape=jax.ShapeDtypeStruct((B, C, HWp), out_dtype),
        grid_spec=pltpu.PrefetchScalarGridSpec(
            num_scalar_prefetch=0,
            grid=(B, num_tiles),
            in_specs=[
                pl.BlockSpec((None, C, tile_hw), lambda b, t: (b, 0, t)),   # x tile
                pl.BlockSpec((Cmid, C), lambda b, t: (0, 0)),               # w1
                pl.BlockSpec((Cmid, 1), lambda b, t: (0, 0)),               # b1
                pl.BlockSpec((C, Cmid), lambda b, t: (0, 0)),               # w2
                pl.BlockSpec((None, C, 1), lambda b, t: (b, 0, 0)),         # b2 + xg
            ],
            out_specs=pl.BlockSpec((None, C, tile_hw), lambda b, t: (b, 0, t)),
        ),
        compiler_params=pltpu.CompilerParams(
            # Every (image, spatial-tile) step is independent -> both axes parallel.
            dimension_semantics=("parallel", "parallel"),
            vmem_limit_bytes=vmem_limit,
        ),
        cost_estimate=cost,
    )(x_flat, w1_k, b1_k, w2_k, b2xg)

    if HWp != HW:
        out = out[:, :, :HW]
    return out.reshape(B, C, H, W)


# ----------------------------------------------------------------------------
# Parameters: Conv1x1 + BatchNorm (eval mode) folded to matmul weight + bias
# ----------------------------------------------------------------------------
def _fold_conv_bn(w_oihw, b_conv, gamma, beta, mean, var, eps=1e-5):
    s = gamma / jnp.sqrt(var + eps)                                    # (Cout,)
    w_mat = jnp.transpose(w_oihw[:, :, 0, 0], (1, 0)) * s[None, :]     # (Cin, Cout)
    bias = (b_conv - mean) * s + beta                                  # (Cout,)
    return w_mat.astype(jnp.float32), bias.astype(jnp.float32)


def make_msca_params(key, channels=64, r=4, eps=1e-5):
    cmid = channels // r
    keys = jax.random.split(key, 4)

    def conv_bn(k, cin, cout):
        kw, kb, kg, kbe, km, kv = jax.random.split(k, 6)
        w_oihw = 0.1 * jax.random.normal(kw, (cout, cin, 1, 1), jnp.float32)
        b_conv = 0.1 * jax.random.normal(kb, (cout,), jnp.float32)
        gamma = 1.0 + 0.1 * jax.random.normal(kg, (cout,), jnp.float32)
        beta = 0.1 * jax.random.normal(kbe, (cout,), jnp.float32)
        mean = 0.1 * jax.random.normal(km, (cout,), jnp.float32)
        var = jnp.abs(1.0 + 0.1 * jax.random.normal(kv, (cout,), jnp.float32))
        return _fold_conv_bn(w_oihw, b_conv, gamma, beta, mean, var, eps)

    w1, b1 = conv_bn(keys[0], channels, cmid)    # local_att conv1 + BN1
    w2, b2 = conv_bn(keys[1], cmid, channels)    # local_att conv2 + BN2
    wg1, bg1 = conv_bn(keys[2], channels, cmid)  # global_att conv1 + BN1
    wg2, bg2 = conv_bn(keys[3], cmid, channels)  # global_att conv2 + BN2
    return {"w1": w1, "b1": b1, "w2": w2, "b2": b2,
            "wg1": wg1, "bg1": bg1, "wg2": wg2, "bg2": bg2}


# ----------------------------------------------------------------------------
# Pure-JAX f32 reference (mirrors the PyTorch eval-mode forward)
# ----------------------------------------------------------------------------
def msca_reference_nchw(x, params):
    B, C, H, W = x.shape
    xf = jnp.transpose(x, (0, 2, 3, 1)).reshape(B, H * W, C).astype(jnp.float32)

    def branch(v, w1, b1, w2, b2):
        h = jnp.maximum(v @ w1 + b1, 0.0)
        return h @ w2 + b2

    xl = branch(xf, params["w1"], params["b1"], params["w2"], params["b2"])
    pooled = jnp.mean(xf, axis=1, keepdims=True)
    xg = branch(pooled, params["wg1"], params["bg1"], params["wg2"], params["bg2"])
    wei = jax.nn.sigmoid(xl + xg)
    return jnp.transpose(wei.reshape(B, H, W, C), (0, 3, 1, 2))


if __name__ == "__main__":
    key = jax.random.PRNGKey(0)
    kx, kp = jax.random.split(key)

    # Module defaults: channels=64, r=4 (mid = 16).  Small spatial extent.
    B, C, H, W = 2, 64, 16, 16
    x = jax.random.normal(kx, (B, C, H, W), jnp.float32)
    params = make_msca_params(kp, channels=C, r=4)

    out = jax.jit(msca_forward)(x, params)
    jax.block_until_ready(out)

    assert out.shape == (B, C, H, W), out.shape

    # Correctness: bf16 MXU operands + bf16 output vs f32 reference (tolerance is
    # intentionally loose to absorb bf16 quantization; the sigmoid itself is exact).
    ref = msca_reference_nchw(x, params)
    max_err = float(jnp.max(jnp.abs(out.astype(jnp.float32) - ref)))
    assert max_err < 5e-2, f"max abs err {max_err}"

    print("KERNEL_OK")
</pallas_src>

<mosaic_0001>
module attributes {stable_mosaic.version = 11 : i64} {
  func.func @_msca_local_kernel(%arg0: i32, %arg1: i32, %arg2: memref<1x64x256xf32, #tpu.memory_space<vmem>>, %arg3: memref<16x64xbf16, #tpu.memory_space<vmem>>, %arg4: memref<16x1xf32, #tpu.memory_space<vmem>>, %arg5: memref<64x16xbf16, #tpu.memory_space<vmem>>, %arg6: memref<1x64x1xf32, #tpu.memory_space<vmem>>, %arg7: memref<1x64x256xbf16, #tpu.memory_space<vmem>>) attributes {dimension_semantics = [#tpu.dimension_semantics<parallel>, #tpu.dimension_semantics<parallel>], iteration_bounds = array<i64: 2, 1>, scalar_prefetch = 0 : i64, scratch_operands = 0 : i64, tpu.core_type = #tpu.core_type<tc>, window_params = [{transform_indices = @transform_0, window_bounds = array<i64: 1, 64, 256>}, {pipeline_mode = #tpu.pipeline_mode<synchronous>, transform_indices = @transform_1, window_bounds = array<i64: 16, 64>}, {pipeline_mode = #tpu.pipeline_mode<synchronous>, transform_indices = @transform_2, window_bounds = array<i64: 16, 1>}, {pipeline_mode = #tpu.pipeline_mode<synchronous>, transform_indices = @transform_3, window_bounds = array<i64: 64, 16>}, {transform_indices = @transform_4, window_bounds = array<i64: 1, 64, 1>}, {transform_indices = @transform_5, window_bounds = array<i64: 1, 64, 256>}]} {
    %c0 = arith.constant 0 : index
    %c0_0 = arith.constant 0 : index
    %c0_1 = arith.constant 0 : index
    %0 = vector.load %arg2[%c0, %c0_0, %c0_1] : memref<1x64x256xf32, #tpu.memory_space<vmem>>, vector<1x64x256xf32>
    %1 = vector.shape_cast %0 : vector<1x64x256xf32> to vector<64x256xf32>
    %2 = arith.truncf %1 : vector<64x256xf32> to vector<64x256xbf16>
    %c0_2 = arith.constant 0 : index
    %c0_3 = arith.constant 0 : index
    %3 = vector.load %arg3[%c0_2, %c0_3] : memref<16x64xbf16, #tpu.memory_space<vmem>>, vector<16x64xbf16>
    %cst = arith.constant dense<0.000000e+00> : vector<16x256xf32>
    %4 = tpu.matmul %3, %2, %cst {dimension_numbers = #tpu.dot_dimension_numbers<[1], [0], [0], [1], [0, 0, 1, 1], [], []>} : vector<16x64xbf16>, vector<64x256xbf16>, vector<16x256xf32> -> vector<16x256xf32>
    %c0_4 = arith.constant 0 : index
    %c0_5 = arith.constant 0 : index
    %5 = vector.load %arg4[%c0_4, %c0_5] : memref<16x1xf32, #tpu.memory_space<vmem>>, vector<16x1xf32>
    %6 = vector.broadcast %5 : vector<16x1xf32> to vector<16x256xf32>
    %7 = arith.addf %4, %6 : vector<16x256xf32>
    %cst_6 = arith.constant 0.000000e+00 : f32
    %8 = vector.broadcast %cst_6 : f32 to vector<16x256xf32>
    %9 = arith.maximumf %7, %8 : vector<16x256xf32>
    %c0_7 = arith.constant 0 : index
    %c0_8 = arith.constant 0 : index
    %10 = vector.load %arg5[%c0_7, %c0_8] : memref<64x16xbf16, #tpu.memory_space<vmem>>, vector<64x16xbf16>
    %11 = arith.truncf %9 : vector<16x256xf32> to vector<16x256xbf16>
    %cst_9 = arith.constant dense<0.000000e+00> : vector<64x256xf32>
    %12 = tpu.matmul %10, %11, %cst_9 {dimension_numbers = #tpu.dot_dimension_numbers<[1], [0], [0], [1], [0, 0, 1, 1], [], []>} : vector<64x16xbf16>, vector<16x256xbf16>, vector<64x256xf32> -> vector<64x256xf32>
    %c0_10 = arith.constant 0 : index
    %c0_11 = arith.constant 0 : index
    %c0_12 = arith.constant 0 : index
    %13 = vector.load %arg6[%c0_10, %c0_11, %c0_12] : memref<1x64x1xf32, #tpu.memory_space<vmem>>, vector<1x64x1xf32>
    %14 = vector.shape_cast %13 : vector<1x64x1xf32> to vector<64x1xf32>
    %15 = vector.broadcast %14 : vector<64x1xf32> to vector<64x256xf32>
    %16 = arith.addf %12, %15 : vector<64x256xf32>
    %cst_13 = arith.constant 5.000000e-01 : f32
    %17 = vector.broadcast %cst_13 : f32 to vector<64x256xf32>
    %18 = arith.mulf %17, %16 : vector<64x256xf32>
    %19 = math.tanh %18 : vector<64x256xf32>
    %cst_14 = arith.constant 5.000000e-01 : f32
    %20 = vector.broadcast %cst_14 : f32 to vector<64x256xf32>
    %21 = arith.mulf %20, %19 : vector<64x256xf32>
    %cst_15 = arith.constant 5.000000e-01 : f32
    %22 = vector.broadcast %cst_15 : f32 to vector<64x256xf32>
    %23 = arith.addf %21, %22 : vector<64x256xf32>
    %24 = arith.truncf %23 : vector<64x256xf32> to vector<64x256xbf16>
    %c0_16 = arith.constant 0 : index
    %c0_17 = arith.constant 0 : index
    %c0_18 = arith.constant 0 : index
    %25 = vector.load %arg7[%c0_16, %c0_17, %c0_18] : memref<1x64x256xbf16, #tpu.memory_space<vmem>>, vector<1x64x256xbf16>
    %26 = vector.shape_cast %25 : vector<1x64x256xbf16> to vector<64x256xbf16>
    %27 = vector.shape_cast %24 : vector<64x256xbf16> to vector<1x64x256xbf16>
    tpu.vector_store %arg7[%c0_16, %c0_17, %c0_18], %27 {strides = array<i32>} : memref<1x64x256xbf16, #tpu.memory_space<vmem>>, vector<1x64x256xbf16>,
    return
  }
  func.func @transform_0(%arg0: i32, %arg1: i32) -> (i32, i32, i32) {
    %c0_i32 = arith.constant 0 : i32
    %c0_i32_0 = arith.constant 0 : i32
    return %arg0, %c0_i32, %arg1 : i32, i32, i32
  }
  func.func @transform_1(%arg0: i32, %arg1: i32) -> (i32, i32) {
    %c0_i32 = arith.constant 0 : i32
    %c0_i32_0 = arith.constant 0 : i32
    %c0_i32_1 = arith.constant 0 : i32
    return %c0_i32, %c0_i32_0 : i32, i32
  }
  func.func @transform_2(%arg0: i32, %arg1: i32) -> (i32, i32) {
    %c0_i32 = arith.constant 0 : i32
    %c0_i32_0 = arith.constant 0 : i32
    %c0_i32_1 = arith.constant 0 : i32
    return %c0_i32, %c0_i32_0 : i32, i32
  }
  func.func @transform_3(%arg0: i32, %arg1: i32) -> (i32, i32) {
    %c0_i32 = arith.constant 0 : i32
    %c0_i32_0 = arith.constant 0 : i32
    %c0_i32_1 = arith.constant 0 : i32
    return %c0_i32, %c0_i32_0 : i32, i32
  }
  func.func @transform_4(%arg0: i32, %arg1: i32) -> (i32, i32, i32) {
    %c0_i32 = arith.constant 0 : i32
    %c0_i32_0 = arith.constant 0 : i32
    %c0_i32_1 = arith.constant 0 : i32
    return %arg0, %c0_i32, %c0_i32_0 : i32, i32, i32
  }
  func.func @transform_5(%arg0: i32, %arg1: i32) -> (i32, i32, i32) {
    %c0_i32 = arith.constant 0 : i32
    %c0_i32_0 = arith.constant 0 : i32
    return %arg0, %c0_i32, %arg1 : i32, i32, i32
  }
}

</mosaic_0001>

<llo_original>
// kernel: msca_forward.1
$region0: #{msca_forward.1}
  #allocation0 [shape = 'u32[]', space=smem, size = 0x4, offset = 0x4, fixed_abs, tag = 'smem constant byte address 0x4 - core index']
  #allocation1 [shape = 'u32[144,128]{1,0:T(1,128)}', space=vmem, size = 0x12000, scoped, tag = 'internal scratch']
  %s0 = inlined_call_operand.vmem [shape: f32[2,64,256], index: 0, kind: input, shape index: {}]
  %s1 = inlined_call_operand.vmem [shape: bf16[16,64], index: 1, kind: input, shape index: {}]
  %s2 = inlined_call_operand.vmem [shape: f32[16,1], index: 2, kind: input, shape index: {}]
  %s3 = inlined_call_operand.vmem [shape: bf16[64,16], index: 3, kind: input, shape index: {}]
  %s4 = inlined_call_operand.vmem [shape: f32[2,64,1], index: 4, kind: input, shape index: {}]
  %s5 = inlined_call_operand.vmem [shape: bf16[2,64,256], index: 5, kind: output, shape index: {}]
  %s6 = sld [smem:[#allocation0]]
  $region53: #{msca_forward.1} parent=0
    _
  %s8 = ssub.s32 1, %s6
  %s9 = scalar_select 0, %s8, %s6
  loop: start=0, step=1, limit=4
  $region2: #{msca_forward.1} parent=0 // loop_pre_header
    _
  $region3: #{msca_forward.1} parent=0 // loop_header
    %s11 = sphi 0, %s15
    %p12 = scmp.ge.s32.totalorder %s11, 4
    %s18 = sphi 0, %s30
    %s19 = sphi 0, %s26
    %s20 = sphi 0, %s18
    %s21 = sphi 0, %s19
    %s22 = sphi 0, %s20
    %s23 = sphi 0, %s21
    %s35 = sphi 0, %s37
    %s38 = sphi 0, %s35
    %s39 = sphi 0, %s38
    %s55 = sphi 0, %s39
    %s59 = sphi 0, %s59
    %s61 = sphi 0, %s59
    %s62 = sphi 0, %s61
    %s76 = sphi 0, %s62
    %s80 = sphi 0, %s80
    %s82 = sphi 0, %s80
    %s83 = sphi 0, %s82
    %s97 = sphi 0, %s83
    %s101 = sphi 0, %s101
    %s103 = sphi 0, %s101
    %s104 = sphi 0, %s103
    %s118 = sphi 0, %s104
    %s124 = sphi 0, %s126
    %s127 = sphi 0, %s124
    %s128 = sphi 0, %s127
    %s144 = sphi 0, %s128
    %s152 = sphi 0, %s154
    %s155 = sphi 0, %s152
    %s156 = sphi 0, %s155
    %s172 = sphi 0, %s156
  $region4: #{msca_forward.1} parent=0 // loop_header_branch
    %14 = sbr.rel (%p12) target = $region8
  $region5: #{msca_forward.1} parent=0 // loop_body
    %s16 = ssub.s32 %s11, 1
    %s17 = ssub.s32 %s11, 2
    %s24 = sadd.s32 1, %s19
    %p25 = scmp.ge.s32.totalorder %s24, 1
    %s26 = scalar_select %p25, 0, %s24
    %s27 = sadd.s32 1, %s18
    %s28 = scalar_select %p25, %s27, %s18
    %p29 = scmp.ge.s32.totalorder %s28, 2
    %s30 = scalar_select %p29, 0, %s28
    %s31 = ssub.s32 %s18, %s30
    %s32 = ssub.s32 %s19, %s26
    %s33 = sor.u32 %s31, %s32
    %p34 = scmp.eq.s32.totalorder %s33, 0
    %s36 = sadd.s32 %s35, 1
    %s37 = scalar_select %p34, %s35, %s36
    %p40 = pneg %p34
    %p41 = scmp.eq.s32.totalorder %s11, 1
    %p42 = por %p40, %p41
    %p43 = scmp.ne.s32.totalorder %s35, %s38
    %p44 = scmp.eq.s32.totalorder %s11, 0
    %p45 = por %p43, %p44
    %p46 = scmp.ne.s32.totalorder %s35, %s38
    %p47 = scmp.eq.s32.totalorder %s16, 1
    %p48 = por %p46, %p47
    %p49 = scmp.ne.s32.totalorder %s38, %s39
    %p50 = scmp.eq.s32.totalorder %s16, 0
    %p51 = por %p49, %p50
    %p52 = scmp.ne.s32.totalorder %s38, %s39
    %p53 = scmp.eq.s32.totalorder %s17, 1
    %p54 = por %p52, %p53
    %p56 = scmp.ne.s32.totalorder %s39, %s55
    %p57 = scmp.eq.s32.totalorder %s17, 0
    %p58 = por %p56, %p57
    %s60 = sadd.s32 %s59, 1
    %p63 = scmp.eq.s32.totalorder %s11, 1
    %p64 = scmp.ne.s32.totalorder %s59, %s61
    %p65 = scmp.eq.s32.totalorder %s11, 0
    %p66 = por %p64, %p65
    %p67 = scmp.ne.s32.totalorder %s59, %s61
    %p68 = scmp.eq.s32.totalorder %s16, 1
    %p69 = por %p67, %p68
    %p70 = scmp.ne.s32.totalorder %s61, %s62
    %p71 = scmp.eq.s32.totalorder %s16, 0
    %p72 = por %p70, %p71
    %p73 = scmp.ne.s32.totalorder %s61, %s62
    %p74 = scmp.eq.s32.totalorder %s17, 1
    %p75 = por %p73, %p74
    %p77 = scmp.ne.s32.totalorder %s62, %s76
    %p78 = scmp.eq.s32.totalorder %s17, 0
    %p79 = por %p77, %p78
    %s81 = sadd.s32 %s80, 1
    %p84 = scmp.eq.s32.totalorder %s11, 1
    %p85 = scmp.ne.s32.totalorder %s80, %s82
    %p86 = scmp.eq.s32.totalorder %s11, 0
    %p87 = por %p85, %p86
    %p88 = scmp.ne.s32.totalorder %s80, %s82
    %p89 = scmp.eq.s32.totalorder %s16, 1
    %p90 = por %p88, %p89
    %p91 = scmp.ne.s32.totalorder %s82, %s83
    %p92 = scmp.eq.s32.totalorder %s16, 0
    %p93 = por %p91, %p92
    %p94 = scmp.ne.s32.totalorder %s82, %s83
    %p95 = scmp.eq.s32.totalorder %s17, 1
    %p96 = por %p94, %p95
    %p98 = scmp.ne.s32.totalorder %s83, %s97
    %p99 = scmp.eq.s32.totalorder %s17, 0
    %p100 = por %p98, %p99
    %s102 = sadd.s32 %s101, 1
    %p105 = scmp.eq.s32.totalorder %s11, 1
    %p106 = scmp.ne.s32.totalorder %s101, %s103
    %p107 = scmp.eq.s32.totalorder %s11, 0
    %p108 = por %p106, %p107
    %p109 = scmp.ne.s32.totalorder %s101, %s103
    %p110 = scmp.eq.s32.totalorder %s16, 1
    %p111 = por %p109, %p110
    %p112 = scmp.ne.s32.totalorder %s103, %s104
    %p113 = scmp.eq.s32.totalorder %s16, 0
    %p114 = por %p112, %p113
    %p115 = scmp.ne.s32.totalorder %s103, %s104
    %p116 = scmp.eq.s32.totalorder %s17, 1
    %p117 = por %p115, %p116
    %p119 = scmp.ne.s32.totalorder %s104, %s118
    %p120 = scmp.eq.s32.totalorder %s17, 0
    %p121 = por %p119, %p120
    %s122 = ssub.s32 %s18, %s30
    %p123 = scmp.eq.s32.totalorder %s122, 0
    %s125 = sadd.s32 %s124, 1
    %s126 = scalar_select %p123, %s124, %s125
    %p129 = pneg %p123
    %p130 = scmp.eq.s32.totalorder %s11, 1
    %p131 = por %p129, %p130
    %p132 = scmp.ne.s32.totalorder %s124, %s127
    %p133 = scmp.eq.s32.totalorder %s11, 0
    %p134 = por %p132, %p133
    %p135 = scmp.ne.s32.totalorder %s124, %s127
    %p136 = scmp.eq.s32.totalorder %s16, 1
    %p137 = por %p135, %p136
    %p138 = scmp.ne.s32.totalorder %s127, %s128
    %p139 = scmp.eq.s32.totalorder %s16, 0
    %p140 = por %p138, %p139
    %p141 = scmp.ne.s32.totalorder %s127, %s128
    %p142 = scmp.eq.s32.totalorder %s17, 1
    %p143 = por %p141, %p142
    %p145 = scmp.ne.s32.totalorder %s128, %s144
    %p146 = scmp.eq.s32.totalorder %s17, 0
    %p147 = por %p145, %p146
    %s148 = ssub.s32 %s18, %s30
    %s149 = ssub.s32 %s19, %s26
    %s150 = sor.u32 %s148, %s149
    %p151 = scmp.eq.s32.totalorder %s150, 0
    %s153 = sadd.s32 %s152, 1
    %s154 = scalar_select %p151, %s152, %s153
    %p157 = pneg %p151
    %p158 = scmp.eq.s32.totalorder %s11, 1
    %p159 = por %p157, %p158
    %p160 = scmp.ne.s32.totalorder %s152, %s155
    %p161 = scmp.eq.s32.totalorder %s11, 0
    %p162 = por %p160, %p161
    %p163 = scmp.ne.s32.totalorder %s152, %s155
    %p164 = scmp.eq.s32.totalorder %s16, 1
    %p165 = por %p163, %p164
    %p166 = scmp.ne.s32.totalorder %s155, %s156
    %p167 = scmp.eq.s32.totalorder %s16, 0
    %p168 = por %p166, %p167
    %p169 = scmp.ne.s32.totalorder %s155, %s156
    %p170 = scmp.eq.s32.totalorder %s17, 1
    %p171 = por %p169, %p170
    %p173 = scmp.ne.s32.totalorder %s156, %s172
    %p174 = scmp.eq.s32.totalorder %s17, 0
    %p175 = por %p173, %p174
    %p176 = scmp.le.s32.totalorder 1, %s11
    %p177 = scmp.lt.s32.totalorder %s11, 3
    %p178 = pnand %p176, %p177
    %p179 = pneg %p178
    // Predicated region
    $region9: #{msca_forward.1} parent=5 // pred_check
      _
    $region10: #{msca_forward.1} parent=5 // pred_check_branch
      %181 = sbr.rel (%p178) target = $region12
    $region11: #{msca_forward.1} parent=5 // pred_region
      %s182 = ssub.s32 %s11, 1
      // Predicated region
      $region13: #{msca_forward.1} parent=11 // pred_check
        %p183 = pneg %p72
      $region14: #{msca_forward.1} parent=11 // pred_check_branch
        %185 = sbr.rel (%p183) target = $region16
      $region15: #{msca_forward.1} parent=11 // pred_region
        _
      $region16: #{msca_forward.1} parent=11 // pred_fallthru
        _
      // Predicated region
      $region17: #{msca_forward.1} parent=11 // pred_check
        %p186 = pneg %p93
      $region18: #{msca_forward.1} parent=11 // pred_check_branch
        %188 = sbr.rel (%p186) target = $region20
      $region19: #{msca_forward.1} parent=11 // pred_region
        _
      $region20: #{msca_forward.1} parent=11 // pred_fallthru
        _
      // Predicated region
      $region21: #{msca_forward.1} parent=11 // pred_check
        %p189 = pneg %p114
      $region22: #{msca_forward.1} parent=11 // pred_check_branch
        %191 = sbr.rel (%p189) target = $region24
      $region23: #{msca_forward.1} parent=11 // pred_region
        _
      $region24: #{msca_forward.1} parent=11 // pred_fallthru
        _
    $region12: #{msca_forward.1} parent=5 // pred_fallthru
      _
    %p192 = scmp.lt.s32.totalorder %s11, 2
    // Predicated region
    $region25: #{msca_forward.1} parent=5 // pred_check
      %p193 = pneg %p192
    $region26: #{msca_forward.1} parent=5 // pred_check_branch
      %195 = sbr.rel (%p193) target = $region28
    $region27: #{msca_forward.1} parent=5 // pred_region
      // Predicated region
      $region29: #{msca_forward.1} parent=27 // pred_check
        %p196 = pneg %p45
      $region30: #{msca_forward.1} parent=27 // pred_check_branch
        %198 = sbr.rel (%p196) target = $region32
      $region31: #{msca_forward.1} parent=27 // pred_region
        %s199 = smul.u32 2, %s19
        %p200 = scmp.lt.s32.totalorder %s18, 1
        %s201 = scalar_select %p200, %s18, 1
        %p202 = scmp.lt.s32.totalorder %s199, 1
        %s203 = scalar_select %p202, %s199, 1
        %s204 = smul.addr %s201, 16
        %s205 = sadd.s32 %s203, %s204
        %s206 = smul.addr %s205, 8
        %s207 = scalar_lea.vmem %s0, %s206
        %s208 = smul.u32 2, %s19
      $region32: #{msca_forward.1} parent=27 // pred_fallthru
        _
      // Predicated region
      $region33: #{msca_forward.1} parent=27 // pred_check
        %p209 = pneg %p134
      $region34: #{msca_forward.1} parent=27 // pred_check_branch
        %211 = sbr.rel (%p209) target = $region36
      $region35: #{msca_forward.1} parent=27 // pred_region
        %p212 = scmp.lt.s32.totalorder %s18, 1
        %s213 = scalar_select %p212, %s18, 1
        %s214 = smul.addr %s213, 8
        %s215 = smul.addr %s214, 8
        %s216 = scalar_lea.vmem %s4, %s215
      $region36: #{msca_forward.1} parent=27 // pred_fallthru
        _
    $region28: #{msca_forward.1} parent=5 // pred_fallthru
      _
    %p217 = scmp.le.s32.totalorder 1, %s11
    %p218 = scmp.lt.s32.totalorder %s11, 3
    %p219 = pnand %p217, %p218
    %p220 = pneg %p219
    // Predicated region
    $region37: #{msca_forward.1} parent=5 // pred_check
      _
    $region38: #{msca_forward.1} parent=5 // pred_check_branch
      %222 = sbr.rel (%p219) target = $region40
    $region39: #{msca_forward.1} parent=5 // pred_region
      %s223 = ssub.s32 %s11, 1
      %s224 = smul.u32 2, %s21
      %p225 = scmp.lt.s32.totalorder %s20, 1
      %s226 = scalar_select %p225, %s20, 1
      %p227 = scmp.lt.s32.totalorder %s224, 1
      %s228 = scalar_select %p227, %s224, 1
      %s229 = smul.addr %s226, 16
      %s230 = sadd.s32 %s228, %s229
      %s231 = smul.addr %s230, 8
      %s232 = scalar_lea.vmem %s0, %s231
      %p233 = pneg %p51
      %p234 = pneg %p48
      %p235 = pneg %p72
      %p236 = pneg %p69
      %p237 = pneg %p93
      %p238 = pneg %p90
      %p239 = pneg %p114
      %p240 = pneg %p111
      %p241 = scmp.lt.s32.totalorder %s20, 1
      %s242 = scalar_select %p241, %s20, 1
      %s243 = smul.addr %s242, 8
      %s244 = smul.addr %s243, 8
      %s245 = scalar_lea.vmem %s4, %s244
      %p246 = pneg %p140
      %p247 = pneg %p137
      %p248 = pneg %p168
      %p249 = pneg %p165
      %s250 = smul.u32 2, %s21
      %p251 = scmp.lt.s32.totalorder %s20, 1
      %s252 = scalar_select %p251, %s20, 1
      %p253 = scmp.lt.s32.totalorder %s250, 1
      %s254 = scalar_select %p253, %s250, 1
      %s255 = smul.addr %s252, 16
      %s256 = sadd.s32 %s254, %s255
      %s257 = smul.addr %s256, 4
      %s258 = scalar_lea.vmem %s5, %s257
      %s259 = smul.u32 2, %s21
      %p260 = scmp.lt.s32.totalorder %s20, 1
      %s261 = scalar_select %p260, %s20, 1
      %p262 = scmp.lt.s32.totalorder %s259, 1
      %s263 = scalar_select %p262, %s259, 1
      %s264 = smul.addr %s261, 16
      %s265 = sadd.s32 %s263, %s264
      %s266 = smul.addr %s265, 8
      %s267 = scalar_lea.vmem %s0, %s266
      %s268 = smul.u32 2, %s21
      %p269 = scmp.lt.s32.totalorder %s20, 1
      %s270 = scalar_select %p269, %s20, 1
      %s271 = smul.addr %s270, 8
      %s272 = smul.addr %s271, 8
      %s273 = scalar_lea.vmem %s4, %s272
      %s274 = smul.u32 2, %s21
      %p275 = scmp.lt.s32.totalorder %s20, 1
      %s276 = scalar_select %p275, %s20, 1
      %p277 = scmp.lt.s32.totalorder %s274, 1
      %s278 = scalar_select %p277, %s274, 1
      %s279 = smul.addr %s276, 16
      %s280 = sadd.s32 %s278, %s279
      %s281 = smul.addr %s280, 4
      %s282 = scalar_lea.vmem %s5, %s281
      %s283 = smul.u32 2, %s21
      %v285 = vld [vmem:[%s267] sm:$0xff]
      %v286 = vld [vmem:[%s267 + $0x8] sm:$0xff]
      %v287 = vld [vmem:[%s267 + $0x10] sm:$0xff]
      %v288 = vld [vmem:[%s267 + $0x18] sm:$0xff]
      %v289 = vld [vmem:[%s267 + $0x20] sm:$0xff]
      %v290 = vld [vmem:[%s267 + $0x28] sm:$0xff]
      %v291 = vld [vmem:[%s267 + $0x30] sm:$0xff]
      %v292 = vld [vmem:[%s267 + $0x38] sm:$0xff]
      %v293 = vld [vmem:[%s267 + $0x40] sm:$0xff]
      %v294 = vld [vmem:[%s267 + $0x48] sm:$0xff]
      %v295 = vld [vmem:[%s267 + $0x50] sm:$0xff]
      %v296 = vld [vmem:[%s267 + $0x58] sm:$0xff]
      %v297 = vld [vmem:[%s267 + $0x60] sm:$0xff]
      %v298 = vld [vmem:[%s267 + $0x68] sm:$0xff]
      %v299 = vld [vmem:[%s267 + $0x70] sm:$0xff]
      %v300 = vld [vmem:[%s267 + $0x78] sm:$0xff]
      %v301 = vpack.c.bf16 %v287, %v285
      %v302 = vpack.c.bf16 %v288, %v286
      %v303 = vpack.c.bf16 %v291, %v289
      %v304 = vpack.c.bf16 %v292, %v290
      %v305 = vpack.c.bf16 %v295, %v293
      %v306 = vpack.c.bf16 %v296, %v294
      %v307 = vpack.c.bf16 %v299, %v297
      %v308 = vpack.c.bf16 %v300, %v298
      %v309 = vld [vmem:[%s1] sm:$0xf]
      %v310 = vld [vmem:[%s1 + $0x4] sm:$0xf]
      %v311 = vld [vmem:[%s2] sm:$0xff]
      %v312 = vld [vmem:[%s2 + $0x8] sm:$0xff]
      %314 = vset.pattern.permute.xlu0 0
      %315 = vperm.xlu0 %314, %v311
      %v316 = vpop.permute.xlu0 %315
      %319 = vset.pattern.permute.xlu0 0
      %320 = vperm.xlu0 %319, %v312
      %v321 = vpop.permute.xlu0 %320
      %v325 = vunpack.c.l.b16 %v309
      %v326 = vunpack.c.l.b16 %v310
      %v327 = vpack.c.b16 %v326, %v325
      %vm328 = vcmask 523264
      %v330 = vsel %vm328, %v327, 0
      %332 = vmatprep.subr.bf16.mxu0 %v302
      %333 = vmatpush1.bf16.msra.mxu0 %v301
      %334 = vmatprep.subr.bf16.mxu0 %v304
      %335 = vmatpush1.bf16.msra.mxu0 %v303
      %336 = vmatprep.subr.bf16.mxu0 %v306
      %337 = vmatpush1.bf16.msra.mxu0 %v305
      %338 = vmatprep.subr.bf16.mxu0 %v308
      %339 = vmatpush1.bf16.msra.mxu0 %v307
      %340 = vmatprep.subr.bf16.mxu0 0
      %341 = vmatpush1.bf16.msra.mxu0 0
      %342 = vmatprep.subr.bf16.mxu0 0
      %343 = vmatpush1.bf16.msra.mxu0 0
      %344 = vmatprep.subr.bf16.mxu0 0
      %345 = vmatpush1.bf16.msra.mxu0 0
      %346 = vmatprep.subr.bf16.mxu0 0
      %347 = vmatpush1.bf16.msra.mxu0 0
      %348 = vmatprep.subr.bf16.mxu0 0
      %349 = vmatpush1.bf16.msra.mxu0 0
      %350 = vmatprep.subr.bf16.mxu0 0
      %351 = vmatpush1.bf16.msra.mxu0 0
      %352 = vmatprep.subr.bf16.mxu0 0
      %353 = vmatpush1.bf16.msra.mxu0 0
      %354 = vmatprep.subr.bf16.mxu0 0
      %355 = vmatpush1.bf16.msra.mxu0 0
      %356 = vmatprep.subr.bf16.mxu0 0
      %357 = vmatpush1.bf16.msra.mxu0 0
      %358 = vmatprep.subr.bf16.mxu0 0
      %359 = vmatpush1.bf16.msra.mxu0 0
      %360 = vmatprep.subr.bf16.mxu0 0
      %361 = vmatpush1.bf16.msra.mxu0 0
      %362 = vmatprep.subr.bf16.mxu0 0
      %363 = vmatpush1.bf16.msra.mxu0 0
      %364 = vmatprep.mubr.bf16.mxu0 0
      %365 = vmatmul.mubr.bf16.gmra.mrb[0].mxu0 %v330
      %v366 = vpop.f32.mrb[0].mxu0
      %v367 = vadd.f32 %v316, %v366
      %v368 = vpop.f32.mrb[0].mxu0
      %v369 = vadd.f32 %v316, %v368
      %v370 = vpop.f32.mrb[0].mxu0
      %v371 = vadd.f32 %v321, %v370
      %v372 = vpop.f32.mrb[0].mxu0
      %v373 = vadd.f32 %v321, %v372
      %374 = vdwg.mxu0
      %v375 = vmax.f32 %v367, 0.0
      %v376 = vmax.f32 %v369, 0.0
      %v377 = vmax.f32 %v371, 0.0
      %v378 = vmax.f32 %v373, 0.0
      %v379 = vld [vmem:[%s3] sm:$0xf]
      %v380 = vld [vmem:[%s3 + $0x4] sm:$0xf]
      %v381 = vld [vmem:[%s3 + $0x8] sm:$0xf]
      %v382 = vld [vmem:[%s3 + $0xc] sm:$0xf]
      %v383 = vld [vmem:[%s3 + $0x10] sm:$0xf]
      %v384 = vld [vmem:[%s3 + $0x14] sm:$0xf]
      %v385 = vld [vmem:[%s3 + $0x18] sm:$0xf]
      %v386 = vld [vmem:[%s3 + $0x1c] sm:$0xf]
      %v387 = vpack.c.bf16 %v377, %v375
      %v388 = vpack.c.bf16 %v378, %v376
      %v389 = vld [vmem:[%s273] sm:$0xff]
      %v390 = vld [vmem:[%s273 + $0x8] sm:$0xff]
      %v391 = vld [vmem:[%s273 + $0x10] sm:$0xff]
      %v392 = vld [vmem:[%s273 + $0x18] sm:$0xff]
      %v393 = vld [vmem:[%s273 + $0x20] sm:$0xff]
      %v394 = vld [vmem:[%s273 + $0x28] sm:$0xff]
      %v395 = vld [vmem:[%s273 + $0x30] sm:$0xff]
      %v396 = vld [vmem:[%s273 + $0x38] sm:$0xff]
      %398 = vset.pattern.permute.xlu0 0
      %399 = vperm.xlu0 %398, %v389
      %v400 = vpop.permute.xlu0 %399
      %403 = vset.pattern.permute.xlu0 0
      %404 = vperm.xlu0 %403, %v390
      %v405 = vpop.permute.xlu0 %404
      %408 = vset.pattern.permute.xlu0 0
      %409 = vperm.xlu0 %408, %v391
      %v410 = vpop.permute.xlu0 %409
      %413 = vset.pattern.permute.xlu0 0
      %414 = vperm.xlu0 %413, %v392
      %v415 = vpop.permute.xlu0 %414
      %418 = vset.pattern.permute.xlu0 0
      %419 = vperm.xlu0 %418, %v393
      %v420 = vpop.permute.xlu0 %419
      %423 = vset.pattern.permute.xlu0 0
      %424 = vperm.xlu0 %423, %v394
      %v425 = vpop.permute.xlu0 %424
      %428 = vset.pattern.permute.xlu0 0
      %429 = vperm.xlu0 %428, %v395
      %v430 = vpop.permute.xlu0 %429
      %433 = vset.pattern.permute.xlu0 0
      %434 = vperm.xlu0 %433, %v396
      %v435 = vpop.permute.xlu0 %434
      %v445 = vunpack.c.l.b16 %v379
      %v446 = vunpack.c.l.b16 %v380
      %v447 = vunpack.c.l.b16 %v381
      %v448 = vunpack.c.l.b16 %v382
      %v449 = vunpack.c.l.b16 %v383
      %v450 = vunpack.c.l.b16 %v384
      %v451 = vunpack.c.l.b16 %v385
      %v452 = vunpack.c.l.b16 %v386
      %v453 = vpack.c.b16 %v446, %v445
      %v454 = vpack.c.b16 %v448, %v447
      %v455 = vpack.c.b16 %v450, %v449
      %v456 = vpack.c.b16 %v452, %v451
      %vm457 = vcmask 130048
      %v459 = vsel %vm457, %v453, 0
      %v462 = vsel %vm457, %v454, 0
      %v465 = vsel %vm457, %v455, 0
      %v468 = vsel %vm457, %v456, 0
      %470 = vmatprep.subr.bf16.mxu0 %v388
      %471 = vmatpush1.bf16.msra.mxu0 %v387
      %472 = vmatprep.subr.bf16.mxu0 0
      %473 = vmatpush1.bf16.msra.mxu0 0
      %474 = vmatprep.subr.bf16.mxu0 0
      %475 = vmatpush1.bf16.msra.mxu0 0
      %476 = vmatprep.subr.bf16.mxu0 0
      %477 = vmatpush1.bf16.msra.mxu0 0
      %478 = vmatprep.subr.bf16.mxu0 0
      %479 = vmatpush1.bf16.msra.mxu0 0
      %480 = vmatprep.subr.bf16.mxu0 0
      %481 = vmatpush1.bf16.msra.mxu0 0
      %482 = vmatprep.subr.bf16.mxu0 0
      %483 = vmatpush1.bf16.msra.mxu0 0
      %484 = vmatprep.subr.bf16.mxu0 0
      %485 = vmatpush1.bf16.msra.mxu0 0
      %486 = vmatprep.subr.bf16.mxu0 0
      %487 = vmatpush1.bf16.msra.mxu0 0
      %488 = vmatprep.subr.bf16.mxu0 0
      %489 = vmatpush1.bf16.msra.mxu0 0
      %490 = vmatprep.subr.bf16.mxu0 0
      %491 = vmatpush1.bf16.msra.mxu0 0
      %492 = vmatprep.subr.bf16.mxu0 0
      %493 = vmatpush1.bf16.msra.mxu0 0
      %494 = vmatprep.subr.bf16.mxu0 0
      %495 = vmatpush1.bf16.msra.mxu0 0
      %496 = vmatprep.subr.bf16.mxu0 0
      %497 = vmatpush1.bf16.msra.mxu0 0
      %498 = vmatprep.subr.bf16.mxu0 0
      %499 = vmatpush1.bf16.msra.mxu0 0
      %500 = vmatprep.subr.bf16.mxu0 0
      %501 = vmatpush1.bf16.msra.mxu0 0
      %502 = vmatprep.mubr.bf16.mxu0 0
      %503 = vmatmul.mubr.bf16.gmra.mrb[0].mxu0 %v459
      %v504 = vpop.f32.mrb[0].mxu0
      %v505 = vadd.f32 %v400, %v504
      %v506 = vpop.f32.mrb[0].mxu0
      %v507 = vadd.f32 %v400, %v506
      %v508 = vpop.f32.mrb[0].mxu0
      %v509 = vadd.f32 %v405, %v508
      %v510 = vpop.f32.mrb[0].mxu0
      %v511 = vadd.f32 %v405, %v510
      %512 = vmatprep.mubr.bf16.mxu0 0
      %513 = vmatmul.mubr.bf16.gmra.mrb[0].mxu0 %v462
      %v514 = vpop.f32.mrb[0].mxu0
      %v515 = vadd.f32 %v410, %v514
      %v516 = vpop.f32.mrb[0].mxu0
      %v517 = vadd.f32 %v410, %v516
      %v518 = vpop.f32.mrb[0].mxu0
      %v519 = vadd.f32 %v415, %v518
      %v520 = vpop.f32.mrb[0].mxu0
      %v521 = vadd.f32 %v415, %v520
      %522 = vmatprep.mubr.bf16.mxu0 0
      %523 = vmatmul.mubr.bf16.gmra.mrb[0].mxu0 %v465
      %v524 = vpop.f32.mrb[0].mxu0
      %v525 = vadd.f32 %v420, %v524
      %v526 = vpop.f32.mrb[0].mxu0
      %v527 = vadd.f32 %v420, %v526
      %v528 = vpop.f32.mrb[0].mxu0
      %v529 = vadd.f32 %v425, %v528
      %v530 = vpop.f32.mrb[0].mxu0
      %v531 = vadd.f32 %v425, %v530
      %532 = vmatprep.mubr.bf16.mxu0 0
      %533 = vmatmul.mubr.bf16.gmra.mrb[0].mxu0 %v468
      %v534 = vpop.f32.mrb[0].mxu0
      %v535 = vadd.f32 %v430, %v534
      %v536 = vpop.f32.mrb[0].mxu0
      %v537 = vadd.f32 %v430, %v536
      %v538 = vpop.f32.mrb[0].mxu0
      %v539 = vadd.f32 %v435, %v538
      %v540 = vpop.f32.mrb[0].mxu0
      %v541 = vadd.f32 %v435, %v540
      %542 = vdwg.mxu0
      %v543 = vmul.f32 %v505, 0.5
      %v544 = vmul.f32 %v507, 0.5
      %v545 = vmul.f32 %v509, 0.5
      %v546 = vmul.f32 %v511, 0.5
      %v547 = vmul.f32 %v515, 0.5
      %v548 = vmul.f32 %v517, 0.5
      %v549 = vmul.f32 %v519, 0.5
      %v550 = vmul.f32 %v521, 0.5
      %v551 = vmul.f32 %v525, 0.5
      %v552 = vmul.f32 %v527, 0.5
      %v553 = vmul.f32 %v529, 0.5
      %v554 = vmul.f32 %v531, 0.5
      %v555 = vmul.f32 %v535, 0.5
      %v556 = vmul.f32 %v537, 0.5
      %v557 = vmul.f32 %v539, 0.5
      %v558 = vmul.f32 %v541, 0.5
      %v559 = vtanh.pop %v543
      %v560 = vtanh.pop %v544
      %v561 = vtanh.pop %v545
      %v562 = vtanh.pop %v546
      %v563 = vtanh.pop %v547
      %v564 = vtanh.pop %v548
      %v565 = vtanh.pop %v549
      %v566 = vtanh.pop %v550
      %v567 = vtanh.pop %v551
      %v568 = vtanh.pop %v552
      %v569 = vtanh.pop %v553
      %v570 = vtanh.pop %v554
      %v571 = vtanh.pop %v555
      %v572 = vtanh.pop %v556
      %v573 = vtanh.pop %v557
      %v574 = vtanh.pop %v558
      %v575 = vmul.f32 %v559, 0.5
      %v576 = vmul.f32 %v560, 0.5
      %v577 = vmul.f32 %v561, 0.5
      %v578 = vmul.f32 %v562, 0.5
      %v579 = vmul.f32 %v563, 0.5
      %v580 = vmul.f32 %v564, 0.5
      %v581 = vmul.f32 %v565, 0.5
      %v582 = vmul.f32 %v566, 0.5
      %v583 = vmul.f32 %v567, 0.5
      %v584 = vmul.f32 %v568, 0.5
      %v585 = vmul.f32 %v569, 0.5
      %v586 = vmul.f32 %v570, 0.5
      %v587 = vmul.f32 %v571, 0.5
      %v588 = vmul.f32 %v572, 0.5
      %v589 = vmul.f32 %v573, 0.5
      %v590 = vmul.f32 %v574, 0.5
      %v591 = vadd.f32 %v575, 0.5
      %v592 = vadd.f32 %v576, 0.5
      %v593 = vadd.f32 %v577, 0.5
      %v594 = vadd.f32 %v578, 0.5
      %v595 = vadd.f32 %v579, 0.5
      %v596 = vadd.f32 %v580, 0.5
      %v597 = vadd.f32 %v581, 0.5
      %v598 = vadd.f32 %v582, 0.5
      %v599 = vadd.f32 %v583, 0.5
      %v600 = vadd.f32 %v584, 0.5
      %v601 = vadd.f32 %v585, 0.5
      %v602 = vadd.f32 %v586, 0.5
      %v603 = vadd.f32 %v587, 0.5
      %v604 = vadd.f32 %v588, 0.5
      %v605 = vadd.f32 %v589, 0.5
      %v606 = vadd.f32 %v590, 0.5
      %v607 = vpack.c.bf16 %v593, %v591
      %v608 = vpack.c.bf16 %v594, %v592
      %v609 = vpack.c.bf16 %v597, %v595
      %v610 = vpack.c.bf16 %v598, %v596
      %v611 = vpack.c.bf16 %v601, %v599
      %v612 = vpack.c.bf16 %v602, %v600
      %v613 = vpack.c.bf16 %v605, %v603
      %v614 = vpack.c.bf16 %v606, %v604
      %v623 = vunpack.c.l.b16 %v607
      %v624 = vunpack.c.l.b16 %v608
      %v625 = vunpack.c.h.b16 %v607
      %v626 = vunpack.c.h.b16 %v608
      %v627 = vunpack.c.l.b16 %v609
      %v628 = vunpack.c.l.b16 %v610
      %v629 = vunpack.c.h.b16 %v609
      %v630 = vunpack.c.h.b16 %v610
      %v631 = vunpack.c.l.b16 %v611
      %v632 = vunpack.c.l.b16 %v612
      %v633 = vunpack.c.h.b16 %v611
      %v634 = vunpack.c.h.b16 %v612
      %v635 = vunpack.c.l.b16 %v613
      %v636 = vunpack.c.l.b16 %v614
      %v637 = vunpack.c.h.b16 %v613
      %v638 = vunpack.c.h.b16 %v614
      %v639 = vpack.c.b16 %v624, %v623
      %v640 = vpack.c.b16 %v626, %v625
      %v641 = vpack.c.b16 %v628, %v627
      %v642 = vpack.c.b16 %v630, %v629
      %v643 = vpack.c.b16 %v632, %v631
      %v644 = vpack.c.b16 %v634, %v633
      %v645 = vpack.c.b16 %v636, %v635
      %v646 = vpack.c.b16 %v638, %v637
      %655 = vst [vmem:[%s282] sm:$0xff] %v639
      %656 = vst [vmem:[%s282 + $0x8] sm:$0xff] %v640
      %657 = vst [vmem:[%s282 + $0x10] sm:$0xff] %v641
      %658 = vst [vmem:[%s282 + $0x18] sm:$0xff] %v642
      %659 = vst [vmem:[%s282 + $0x20] sm:$0xff] %v643
      %660 = vst [vmem:[%s282 + $0x28] sm:$0xff] %v644
      %661 = vst [vmem:[%s282 + $0x30] sm:$0xff] %v645
      %662 = vst [vmem:[%s282 + $0x38] sm:$0xff] %v646
      %s663 = smul.u32 2, %s21
      %p664 = scmp.lt.s32.totalorder %s20, 1
      %s665 = scalar_select %p664, %s20, 1
      %p666 = scmp.lt.s32.totalorder %s663, 1
      %s667 = scalar_select %p666, %s663, 1
      %s668 = smul.addr %s665, 16
      %s669 = sadd.s32 %s667, %s668
      %s670 = smul.addr %s669, 4
      %s671 = scalar_lea.vmem %s5, %s670
      // Predicated region
      $region41: #{msca_forward.1} parent=39 // pred_check
        %p672 = pneg %p165
      $region42: #{msca_forward.1} parent=39 // pred_check_branch
        %674 = sbr.rel (%p672) target = $region44
      $region43: #{msca_forward.1} parent=39 // pred_region
        %s675 = smul.u32 2, %s21
      $region44: #{msca_forward.1} parent=39 // pred_fallthru
        _
    $region40: #{msca_forward.1} parent=5 // pred_fallthru
      _
    %p676 = scmp.le.s32.totalorder 2, %s11
    // Predicated region
    $region45: #{msca_forward.1} parent=5 // pred_check
      %p677 = pneg %p676
    $region46: #{msca_forward.1} parent=5 // pred_check_branch
      %679 = sbr.rel (%p677) target = $region48
    $region47: #{msca_forward.1} parent=5 // pred_region
      %s680 = ssub.s32 %s11, 2
      // Predicated region
      $region49: #{msca_forward.1} parent=47 // pred_check
        %p681 = pneg %p171
      $region50: #{msca_forward.1} parent=47 // pred_check_branch
        %683 = sbr.rel (%p681) target = $region52
      $region51: #{msca_forward.1} parent=47 // pred_region
        %s684 = smul.u32 2, %s23
        %p685 = scmp.lt.s32.totalorder %s22, 1
        %s686 = scalar_select %p685, %s22, 1
        %p687 = scmp.lt.s32.totalorder %s684, 1
        %s688 = scalar_select %p687, %s684, 1
        %s689 = smul.addr %s686, 16
        %s690 = sadd.s32 %s688, %s689
        %s691 = smul.addr %s690, 4
        %s692 = scalar_lea.vmem %s5, %s691
      $region52: #{msca_forward.1} parent=47 // pred_fallthru
        _
    $region48: #{msca_forward.1} parent=5 // pred_fallthru
      _
  $region6: #{msca_forward.1} parent=0 // loop_footer
    %s15 = sadd.s32 1, %s11
  $region7: #{msca_forward.1} parent=0 // loop_footer_branch
    %10 = sbr.rel target = $region3
  $region8: #{msca_forward.1} parent=0 // loop_exit
    _

</llo_original>
